<compile_context>
chip_gen: v5e
topology: v5e:2x2
jax: 0.10.0
libtpu: 0.0.40
codegen_flags: <defaults>
</compile_context>

<pallas_src>
import functools

import jax
import jax.numpy as jnp
from jax import lax
from jax.experimental import pallas as pl
from jax.experimental.pallas import tpu as pltpu

# problem constants (from the PyTorch module)
CI = 64        # in_channels
CO = 3         # out_channels
K = 7          # kernel size
STRIDE = 2
PAD = 3

CO_PAD = 8     # out-channel sublane padding (3 real channels + 5 zero rows)
TH = 4         # max row taps per phase (4 for odd output rows, 3 for even)
TW = 4         # max col taps per phase


def _phase_kernel(w_ref, x_ref, o_ref, *, qh, qw):
    """One (image, phase) grid step.

    w_ref: (TW, CO_PAD, TH*CI)   phase weights, row taps folded into contraction
    x_ref: (HP, CI, WIP)         padded input: channels on sublanes, width on lanes
    o_ref: (QH, CO_PAD, QW)      one parity phase of the output
    """
    w_taps = [w_ref[i] for i in range(TW)]              # each (CO_PAD, TH*CI)

    def row(q, carry):
        # rows q..q+TH-1 of the padded input; (TH, CI) flattens to the
        # contraction dim (lane axis untouched -> layout-free reshape).
        chunk = x_ref[pl.ds(q, TH)]                     # (TH, CI, WIP)
        acc = jnp.zeros((CO_PAD, qw), jnp.float32)
        for i in range(TW):                             # static unroll: 4 width taps
            patch = chunk[:, :, i:i + qw].reshape(TH * CI, qw)
            acc = acc + jnp.dot(w_taps[i], patch,
                                preferred_element_type=jnp.float32)
        o_ref[q] = acc
        return carry

    lax.fori_loop(0, qh, row, 0)


def _pack_weights(weight):
    """(CI, CO, K, K) ConvTranspose2d weights -> (4, TW, CO_PAD, TH*CI).

    Phase p = 2*(oh % 2) + (ow % 2).  Row tap j of phase a uses kh = (5|6) - 2j,
    col tap i of phase b uses kw = (5|6) - 2i; out-of-range taps stay zero.
    """
    w = jnp.asarray(weight, jnp.float32)
    wk = jnp.zeros((2, 2, TW, CO_PAD, TH, CI), jnp.float32)
    for a in range(2):
        for j in range(TH):
            kh = (5 if a == 0 else 6) - 2 * j
            if not 0 <= kh < K:
                continue
            for b in range(2):
                for i in range(TW):
                    kw = (5 if b == 0 else 6) - 2 * i
                    if not 0 <= kw < K:
                        continue
                    wk = wk.at[a, b, i, :CO, j, :].set(w[:, :, kh, kw].T)
    return wk.reshape(4, TW, CO_PAD, TH * CI)


def deconv_layer1(x_nchw, weight):
    """ConvTranspose2d(64, 3, kernel_size=7, stride=2, padding=3, bias=False).

    x_nchw: (N, 64, H, W) float32
    weight: (64, 3, 7, 7) float32 (PyTorch ConvTranspose2d layout: Ci, Co, kH, kW)
    returns (N, 3, 2H-1, 2W-1) float32
    """
    n, ci, h, w = x_nchw.shape
    assert ci == CI
    oh = (h - 1) * STRIDE - 2 * PAD + K                 # = 2H - 1
    ow = (w - 1) * STRIDE - 2 * PAD + K                 # = 2W - 1
    qh, qw = h, w                                       # per-phase output extents
    hp, wip = h + 3, w + 4                              # 1-pixel front halo, 2-3 behind

    # glue: (N,CI,H,W) -> (N,H,CI,W) with a zero halo (width on lanes)
    xt = jnp.transpose(x_nchw.astype(jnp.float32), (0, 2, 1, 3))
    xp = jnp.pad(xt, ((0, 0), (1, 2), (0, 0), (1, 3)))  # (N, HP, CI, WIP)

    wk = _pack_weights(weight)                          # (4, TW, CO_PAD, TH*CI)
    # TODO(synk): on v6e/v7x cast xp/wk to bfloat16 (keeping f32 accumulation)
    # for ~2x DMA / MXU throughput; kept f32 to preserve module numerics.

    kernel = functools.partial(_phase_kernel, qh=qh, qw=qw)
    out = pl.pallas_call(
        kernel,
        out_shape=jax.ShapeDtypeStruct((n, 4, qh, CO_PAD, qw), jnp.float32),
        grid_spec=pltpu.PrefetchScalarGridSpec(
            num_scalar_prefetch=0,
            grid=(n, 4),
            in_specs=[
                pl.BlockSpec((None, TW, CO_PAD, TH * CI),
                             lambda b, p: (p, 0, 0, 0)),
                pl.BlockSpec((None, hp, CI, wip),
                             lambda b, p: (b, 0, 0, 0)),
            ],
            out_specs=pl.BlockSpec((None, None, qh, CO_PAD, qw),
                                   lambda b, p: (b, p, 0, 0, 0)),
        ),
        compiler_params=pltpu.CompilerParams(
            dimension_semantics=("parallel", "parallel"),
            vmem_limit_bytes=32 * 1024 * 1024),
    )(wk, xp)

    # interleave phases: out[n, 2a+b, q, co, r] -> y[n, co, 2q+a, 2r+b]
    ph = out[:, :, :, :CO, :].reshape(n, 2, 2, qh, CO, qw)
    ph = jnp.transpose(ph, (0, 4, 3, 1, 5, 2))          # (N, CO, QH, 2, QW, 2)
    return ph.reshape(n, CO, 2 * h, 2 * w)[:, :, :oh, :ow]


def _reference(x_nchw, weight):
    # transposed conv == lhs-dilated correlation with flipped / channel-swapped kernel
    w_conv = jnp.transpose(jnp.flip(weight, (2, 3)), (1, 0, 2, 3))  # (Co,Ci,K,K)
    return lax.conv_general_dilated(
        x_nchw, w_conv,
        window_strides=(1, 1),
        padding=[(K - 1 - PAD, K - 1 - PAD)] * 2,
        lhs_dilation=(STRIDE, STRIDE),
        dimension_numbers=('NCHW', 'OIHW', 'NCHW'))


if __name__ == "__main__":
    key = jax.random.PRNGKey(0)
    kx, kwt = jax.random.split(key)
    N, H, W = 2, 16, 16
    x = jax.random.normal(kx, (N, CI, H, W), dtype=jnp.float32)
    # deterministic synthetic weights, PyTorch ConvTranspose2d shape (Ci, Co, kH, kW)
    weight = jax.random.normal(kwt, (CI, CO, K, K), dtype=jnp.float32) * 0.05

    y = deconv_layer1(x, weight)
    y = jax.block_until_ready(y)
    assert y.shape == (N, CO, 2 * H - 1, 2 * W - 1), y.shape

    y_ref = _reference(x, weight)
    assert jnp.allclose(y, y_ref, atol=1e-3, rtol=1e-3), \
        float(jnp.max(jnp.abs(y - y_ref)))

    print("KERNEL_OK")
</pallas_src>

<mosaic_0001>
module attributes {stable_mosaic.version = 11 : i64} {
  func.func @_phase_kernel(%arg0: i32, %arg1: i32, %arg2: memref<1x4x8x256xf32, #tpu.memory_space<vmem>>, %arg3: memref<1x19x64x20xf32, #tpu.memory_space<vmem>>, %arg4: memref<1x1x16x8x16xf32, #tpu.memory_space<vmem>>) attributes {dimension_semantics = [#tpu.dimension_semantics<parallel>, #tpu.dimension_semantics<parallel>], iteration_bounds = array<i64: 2, 4>, scalar_prefetch = 0 : i64, scratch_operands = 0 : i64, tpu.core_type = #tpu.core_type<tc>, window_params = [{transform_indices = @transform_0, window_bounds = array<i64: 1, 4, 8, 256>}, {transform_indices = @transform_1, window_bounds = array<i64: 1, 19, 64, 20>}, {transform_indices = @transform_2, window_bounds = array<i64: 1, 1, 16, 8, 16>}]} {
    %c0 = arith.constant 0 : index
    %c0_0 = arith.constant 0 : index
    %c0_1 = arith.constant 0 : index
    %c0_2 = arith.constant 0 : index
    %0 = vector.load %arg2[%c0, %c0_0, %c0_1, %c0_2] : memref<1x4x8x256xf32, #tpu.memory_space<vmem>>, vector<1x1x8x256xf32>
    %1 = vector.shape_cast %0 : vector<1x1x8x256xf32> to vector<8x256xf32>
    %c0_3 = arith.constant 0 : index
    %c1 = arith.constant 1 : index
    %c0_4 = arith.constant 0 : index
    %c0_5 = arith.constant 0 : index
    %2 = vector.load %arg2[%c0_3, %c1, %c0_4, %c0_5] : memref<1x4x8x256xf32, #tpu.memory_space<vmem>>, vector<1x1x8x256xf32>
    %3 = vector.shape_cast %2 : vector<1x1x8x256xf32> to vector<8x256xf32>
    %c0_6 = arith.constant 0 : index
    %c2 = arith.constant 2 : index
    %c0_7 = arith.constant 0 : index
    %c0_8 = arith.constant 0 : index
    %4 = vector.load %arg2[%c0_6, %c2, %c0_7, %c0_8] : memref<1x4x8x256xf32, #tpu.memory_space<vmem>>, vector<1x1x8x256xf32>
    %5 = vector.shape_cast %4 : vector<1x1x8x256xf32> to vector<8x256xf32>
    %c0_9 = arith.constant 0 : index
    %c3 = arith.constant 3 : index
    %c0_10 = arith.constant 0 : index
    %c0_11 = arith.constant 0 : index
    %6 = vector.load %arg2[%c0_9, %c3, %c0_10, %c0_11] : memref<1x4x8x256xf32, #tpu.memory_space<vmem>>, vector<1x1x8x256xf32>
    %7 = vector.shape_cast %6 : vector<1x1x8x256xf32> to vector<8x256xf32>
    %c0_i32 = arith.constant 0 : i32
    %c16_i32 = arith.constant 16 : i32
    %8 = arith.addi %c0_i32, %c16_i32 : i32
    %c1_i32 = arith.constant 1 : i32
    scf.for %arg5 = %c0_i32 to %8 step %c1_i32  : i32 {
      %c0_13 = arith.constant 0 : index
      %9 = arith.index_cast %arg5 : i32 to index
      %c0_14 = arith.constant 0 : index
      %c0_15 = arith.constant 0 : index
      %10 = vector.load %arg3[%c0_13, %9, %c0_14, %c0_15] : memref<1x19x64x20xf32, #tpu.memory_space<vmem>>, vector<1x4x64x20xf32>
      %11 = vector.shape_cast %10 : vector<1x4x64x20xf32> to vector<4x64x20xf32>
      %cst = arith.constant 0.000000e+00 : f32
      %12 = vector.broadcast %cst : f32 to vector<8x16xf32>
      %13 = vector.extract_strided_slice %11 {offsets = [0, 0, 0], sizes = [4, 64, 16], strides = [1, 1, 1]} : vector<4x64x20xf32> to vector<4x64x16xf32>
      %14 = vector.shape_cast %13 : vector<4x64x16xf32> to vector<256x16xf32>
      %cst_16 = arith.constant dense<0.000000e+00> : vector<8x16xf32>
      %15 = tpu.matmul %1, %14, %cst_16 {dimension_numbers = #tpu.dot_dimension_numbers<[1], [0], [0], [1], [0, 0, 1, 1], [], []>} : vector<8x256xf32>, vector<256x16xf32>, vector<8x16xf32> -> vector<8x16xf32>
      %16 = arith.addf %12, %15 : vector<8x16xf32>
      %17 = vector.extract_strided_slice %11 {offsets = [0, 0, 1], sizes = [4, 64, 16], strides = [1, 1, 1]} : vector<4x64x20xf32> to vector<4x64x16xf32>
      %18 = vector.shape_cast %17 : vector<4x64x16xf32> to vector<256x16xf32>
      %cst_17 = arith.constant dense<0.000000e+00> : vector<8x16xf32>
      %19 = tpu.matmul %3, %18, %cst_17 {dimension_numbers = #tpu.dot_dimension_numbers<[1], [0], [0], [1], [0, 0, 1, 1], [], []>} : vector<8x256xf32>, vector<256x16xf32>, vector<8x16xf32> -> vector<8x16xf32>
      %20 = arith.addf %16, %19 : vector<8x16xf32>
      %21 = vector.extract_strided_slice %11 {offsets = [0, 0, 2], sizes = [4, 64, 16], strides = [1, 1, 1]} : vector<4x64x20xf32> to vector<4x64x16xf32>
      %22 = vector.shape_cast %21 : vector<4x64x16xf32> to vector<256x16xf32>
      %cst_18 = arith.constant dense<0.000000e+00> : vector<8x16xf32>
      %23 = tpu.matmul %5, %22, %cst_18 {dimension_numbers = #tpu.dot_dimension_numbers<[1], [0], [0], [1], [0, 0, 1, 1], [], []>} : vector<8x256xf32>, vector<256x16xf32>, vector<8x16xf32> -> vector<8x16xf32>
      %24 = arith.addf %20, %23 : vector<8x16xf32>
      %25 = vector.extract_strided_slice %11 {offsets = [0, 0, 3], sizes = [4, 64, 16], strides = [1, 1, 1]} : vector<4x64x20xf32> to vector<4x64x16xf32>
      %26 = vector.shape_cast %25 : vector<4x64x16xf32> to vector<256x16xf32>
      %cst_19 = arith.constant dense<0.000000e+00> : vector<8x16xf32>
      %27 = tpu.matmul %7, %26, %cst_19 {dimension_numbers = #tpu.dot_dimension_numbers<[1], [0], [0], [1], [0, 0, 1, 1], [], []>} : vector<8x256xf32>, vector<256x16xf32>, vector<8x16xf32> -> vector<8x16xf32>
      %28 = arith.addf %24, %27 : vector<8x16xf32>
      %c0_20 = arith.constant 0 : index
      %c0_21 = arith.constant 0 : index
      %29 = arith.index_cast %arg5 : i32 to index
      %c0_22 = arith.constant 0 : index
      %c0_23 = arith.constant 0 : index
      %30 = vector.load %arg4[%c0_20, %c0_21, %29, %c0_22, %c0_23] : memref<1x1x16x8x16xf32, #tpu.memory_space<vmem>>, vector<1x1x1x8x16xf32>
      %31 = vector.shape_cast %30 : vector<1x1x1x8x16xf32> to vector<8x16xf32>
      %32 = vector.shape_cast %28 : vector<8x16xf32> to vector<1x1x1x8x16xf32>
      tpu.vector_store %arg4[%c0_20, %c0_21, %29, %c0_22, %c0_23], %32 {strides = array<i32>} : memref<1x1x16x8x16xf32, #tpu.memory_space<vmem>>, vector<1x1x1x8x16xf32>,
    }
    %c16_i32_12 = arith.constant 16 : i32
    return
  }
  func.func @transform_0(%arg0: i32, %arg1: i32) -> (i32, i32, i32, i32) {
    %c0_i32 = arith.constant 0 : i32
    %c0_i32_0 = arith.constant 0 : i32
    %c0_i32_1 = arith.constant 0 : i32
    %c0_i32_2 = arith.constant 0 : i32
    return %arg1, %c0_i32, %c0_i32_0, %c0_i32_1 : i32, i32, i32, i32
  }
  func.func @transform_1(%arg0: i32, %arg1: i32) -> (i32, i32, i32, i32) {
    %c0_i32 = arith.constant 0 : i32
    %c0_i32_0 = arith.constant 0 : i32
    %c0_i32_1 = arith.constant 0 : i32
    %c0_i32_2 = arith.constant 0 : i32
    return %arg0, %c0_i32, %c0_i32_0, %c0_i32_1 : i32, i32, i32, i32
  }
  func.func @transform_2(%arg0: i32, %arg1: i32) -> (i32, i32, i32, i32, i32) {
    %c0_i32 = arith.constant 0 : i32
    %c0_i32_0 = arith.constant 0 : i32
    %c0_i32_1 = arith.constant 0 : i32
    %c0_i32_2 = arith.constant 0 : i32
    return %arg0, %arg1, %c0_i32, %c0_i32_0, %c0_i32_1 : i32, i32, i32, i32, i32
  }
}

</mosaic_0001>

<llo_original>
// kernel: tpu_custom_call.1
$region0: #{tpu_custom_call.1}
  #allocation0 [shape = 'u32[]', space=smem, size = 0x4, offset = 0x4, fixed_abs, tag = 'smem constant byte address 0x4 - core index']
  #allocation1 [shape = 'u32[72,128]{1,0:T(1,128)}', space=vmem, size = 0x9000, scoped, tag = 'internal scratch']
  %s0 = inlined_call_operand.vmem [shape: f32[4,4,8,256], index: 0, kind: input, shape index: {}]
  %s1 = inlined_call_operand.vmem [shape: f32[2,19,64,20], index: 1, kind: input, shape index: {}]
  %s2 = inlined_call_operand.hbm [shape: f32[2,4,16,8,16], index: 2, kind: output, shape index: {}]
  %s3 = sld [smem:[#allocation0]]
  $region48: #{tpu_custom_call.1} parent=0
    _
  %s5 = ssub.s32 1, %s3
  %s6 = scalar_select 0, %s5, %s3
  $region1: #{tpu_custom_call.1} parent=0
    #allocation2 [shape = 'u8[131072]{0}', space=vmem, size = 0x20000, scoped, tag = 'output window, operand 0']
    #allocation3 [shape = 's32[2]{0}', space=sflag, size = 0x8, scoped, tag = 'scoped memory for tpu_custom_call.1']
    %7 = vsyncpa [#allocation3], 0
    %s8 = scalar_lea.sflag [#allocation3], 1
    %9 = vsyncpa %s8, 0
    loop: start=0, step=1, limit=10
    $region2: #{tpu_custom_call.1} parent=1 // loop_pre_header
      _
    $region3: #{tpu_custom_call.1} parent=1 // loop_header
      %s11 = sphi 0, %s15
      %p12 = scmp.ge.s32.totalorder %s11, 10
      %s18 = sphi 0, %s30
      %s19 = sphi 0, %s26
      %s20 = sphi 0, %s18
      %s21 = sphi 0, %s19
      %s22 = sphi 0, %s20
      %s23 = sphi 0, %s21
      %s33 = sphi 0, %s35
      %s36 = sphi 0, %s33
      %s37 = sphi 0, %s36
      %s53 = sphi 0, %s37
      %s59 = sphi 0, %s61
      %s62 = sphi 0, %s59
      %s63 = sphi 0, %s62
      %s79 = sphi 0, %s63
      %s87 = sphi 0, %s89
      %s90 = sphi 0, %s87
      %s91 = sphi 0, %s90
      %s107 = sphi 0, %s91
    $region4: #{tpu_custom_call.1} parent=1 // loop_header_branch
      %14 = sbr.rel (%p12) target = $region8
    $region5: #{tpu_custom_call.1} parent=1 // loop_body
      %s16 = ssub.s32 %s11, 1
      %s17 = ssub.s32 %s11, 2
      %s24 = sadd.s32 1, %s19
      %p25 = scmp.ge.s32.totalorder %s24, 4
      %s26 = scalar_select %p25, 0, %s24
      %s27 = sadd.s32 1, %s18
      %s28 = scalar_select %p25, %s27, %s18
      %p29 = scmp.ge.s32.totalorder %s28, 2
      %s30 = scalar_select %p29, 0, %s28
      %s31 = ssub.s32 %s19, %s26
      %p32 = scmp.eq.s32.totalorder %s31, 0
      %s34 = sadd.s32 %s33, 1
      %s35 = scalar_select %p32, %s33, %s34
      %p38 = pneg %p32
      %p39 = scmp.eq.s32.totalorder %s11, 7
      %p40 = por %p38, %p39
      %p41 = scmp.ne.s32.totalorder %s33, %s36
      %p42 = scmp.eq.s32.totalorder %s11, 0
      %p43 = por %p41, %p42
      %p44 = scmp.ne.s32.totalorder %s33, %s36
      %p45 = scmp.eq.s32.totalorder %s16, 7
      %p46 = por %p44, %p45
      %p47 = scmp.ne.s32.totalorder %s36, %s37
      %p48 = scmp.eq.s32.totalorder %s16, 0
      %p49 = por %p47, %p48
      %p50 = scmp.ne.s32.totalorder %s36, %s37
      %p51 = scmp.eq.s32.totalorder %s17, 7
      %p52 = por %p50, %p51
      %p54 = scmp.ne.s32.totalorder %s37, %s53
      %p55 = scmp.eq.s32.totalorder %s17, 0
      %p56 = por %p54, %p55
      %s57 = ssub.s32 %s18, %s30
      %p58 = scmp.eq.s32.totalorder %s57, 0
      %s60 = sadd.s32 %s59, 1
      %s61 = scalar_select %p58, %s59, %s60
      %p64 = pneg %p58
      %p65 = scmp.eq.s32.totalorder %s11, 7
      %p66 = por %p64, %p65
      %p67 = scmp.ne.s32.totalorder %s59, %s62
      %p68 = scmp.eq.s32.totalorder %s11, 0
      %p69 = por %p67, %p68
      %p70 = scmp.ne.s32.totalorder %s59, %s62
      %p71 = scmp.eq.s32.totalorder %s16, 7
      %p72 = por %p70, %p71
      %p73 = scmp.ne.s32.totalorder %s62, %s63
      %p74 = scmp.eq.s32.totalorder %s16, 0
      %p75 = por %p73, %p74
      %p76 = scmp.ne.s32.totalorder %s62, %s63
      %p77 = scmp.eq.s32.totalorder %s17, 7
      %p78 = por %p76, %p77
      %p80 = scmp.ne.s32.totalorder %s63, %s79
      %p81 = scmp.eq.s32.totalorder %s17, 0
      %p82 = por %p80, %p81
      %s83 = ssub.s32 %s18, %s30
      %s84 = ssub.s32 %s19, %s26
      %s85 = sor.u32 %s83, %s84
      %p86 = scmp.eq.s32.totalorder %s85, 0
      %s88 = sadd.s32 %s87, 1
      %s89 = scalar_select %p86, %s87, %s88
      %p92 = pneg %p86
      %p93 = scmp.eq.s32.totalorder %s11, 7
      %p94 = por %p92, %p93
      %p95 = scmp.ne.s32.totalorder %s87, %s90
      %p96 = scmp.eq.s32.totalorder %s11, 0
      %p97 = por %p95, %p96
      %p98 = scmp.ne.s32.totalorder %s87, %s90
      %p99 = scmp.eq.s32.totalorder %s16, 7
      %p100 = por %p98, %p99
      %p101 = scmp.ne.s32.totalorder %s90, %s91
      %p102 = scmp.eq.s32.totalorder %s16, 0
      %p103 = por %p101, %p102
      %p104 = scmp.ne.s32.totalorder %s90, %s91
      %p105 = scmp.eq.s32.totalorder %s17, 7
      %p106 = por %p104, %p105
      %p108 = scmp.ne.s32.totalorder %s91, %s107
      %p109 = scmp.eq.s32.totalorder %s17, 0
      %p110 = por %p108, %p109
      %p111 = scmp.le.s32.totalorder 1, %s11
      %p112 = scmp.lt.s32.totalorder %s11, 9
      %p113 = pnand %p111, %p112
      %p114 = pneg %p113
      // Predicated region
      $region9: #{tpu_custom_call.1} parent=5 // pred_check
        _
      $region10: #{tpu_custom_call.1} parent=5 // pred_check_branch
        %116 = sbr.rel (%p113) target = $region12
      $region11: #{tpu_custom_call.1} parent=5 // pred_region
        %s117 = ssub.s32 %s11, 1
      $region12: #{tpu_custom_call.1} parent=5 // pred_fallthru
        _
      %p118 = scmp.lt.s32.totalorder %s11, 8
      // Predicated region
      $region13: #{tpu_custom_call.1} parent=5 // pred_check
        %p119 = pneg %p118
      $region14: #{tpu_custom_call.1} parent=5 // pred_check_branch
        %121 = sbr.rel (%p119) target = $region16
      $region15: #{tpu_custom_call.1} parent=5 // pred_region
        // Predicated region
        $region17: #{tpu_custom_call.1} parent=15 // pred_check
          %p122 = pneg %p43
        $region18: #{tpu_custom_call.1} parent=15 // pred_check_branch
          %124 = sbr.rel (%p122) target = $region20
        $region19: #{tpu_custom_call.1} parent=15 // pred_region
          %p125 = scmp.lt.s32.totalorder %s19, 3
          %s126 = scalar_select %p125, %s19, 3
          %s127 = smul.addr %s126, 8
          %s128 = smul.addr %s127, 8
          %s129 = scalar_lea.vmem %s0, %s128
        $region20: #{tpu_custom_call.1} parent=15 // pred_fallthru
          _
        // Predicated region
        $region21: #{tpu_custom_call.1} parent=15 // pred_check
          %p130 = pneg %p69
        $region22: #{tpu_custom_call.1} parent=15 // pred_check_branch
          %132 = sbr.rel (%p130) target = $region24
        $region23: #{tpu_custom_call.1} parent=15 // pred_region
          %p133 = scmp.lt.s32.totalorder %s18, 1
          %s134 = scalar_select %p133, %s18, 1
          %s135 = smul.addr %s134, 152
          %s136 = smul.addr %s135, 8
          %s137 = scalar_lea.vmem %s1, %s136
        $region24: #{tpu_custom_call.1} parent=15 // pred_fallthru
          _
      $region16: #{tpu_custom_call.1} parent=5 // pred_fallthru
        _
      %p138 = scmp.le.s32.totalorder 1, %s11
      %p139 = scmp.lt.s32.totalorder %s11, 9
      %p140 = pnand %p138, %p139
      %p141 = pneg %p140
      // Predicated region
      $region25: #{tpu_custom_call.1} parent=5 // pred_check
        _
      $region26: #{tpu_custom_call.1} parent=5 // pred_check_branch
        %143 = sbr.rel (%p140) target = $region28
      $region27: #{tpu_custom_call.1} parent=5 // pred_region
        %s144 = ssub.s32 %s11, 1
        %p145 = scmp.lt.s32.totalorder %s21, 3
        %s146 = scalar_select %p145, %s21, 3
        %s147 = smul.addr %s146, 8
        %s148 = smul.addr %s147, 8
        %s149 = scalar_lea.vmem %s0, %s148
        %p150 = pneg %p49
        %p151 = pneg %p46
        %p152 = scmp.lt.s32.totalorder %s20, 1
        %s153 = scalar_select %p152, %s20, 1
        %s154 = smul.addr %s153, 152
        %s155 = smul.addr %s154, 8
        %s156 = scalar_lea.vmem %s1, %s155
        %p157 = pneg %p75
        %p158 = pneg %p72
        %p159 = pneg %p103
        %p160 = pneg %p100
        %s161 = sand.u32 %s90, 1
        %s162 = scalar_lea.sflag [#allocation3], %s161
        %s163 = sand.u32 %s90, 1
        %s164 = smul.addr %s163, 128
        %s165 = scalar_lea.vmem [#allocation2], %s164
        %p166 = scmp.lt.s32.totalorder %s21, 3
        %s167 = scalar_select %p166, %s21, 3
        %s168 = smul.addr %s167, 8
        %s169 = smul.addr %s168, 8
        %s170 = scalar_lea.vmem %s0, %s169
        %p171 = scmp.lt.s32.totalorder %s20, 1
        %s172 = scalar_select %p171, %s20, 1
        %s173 = smul.addr %s172, 152
        %s174 = smul.addr %s173, 8
        %s175 = scalar_lea.vmem %s1, %s174
        %v176 = vld [vmem:[%s170] sm:$0xff]
        %v177 = vld [vmem:[%s170 + $0x8] sm:$0xff]
        %s178 = scalar_lea.vmem %s170, 16
        %v179 = vld [vmem:[%s178] sm:$0xff]
        %v180 = vld [vmem:[%s178 + $0x8] sm:$0xff]
        %s181 = scalar_lea.vmem %s170, 32
        %v182 = vld [vmem:[%s181] sm:$0xff]
        %v183 = vld [vmem:[%s181 + $0x8] sm:$0xff]
        %s184 = scalar_lea.vmem %s170, 48
        %v185 = vld [vmem:[%s184] sm:$0xff]
        %v186 = vld [vmem:[%s184 + $0x8] sm:$0xff]
        loop: start=0, step=1, limit=16
        $region29: #{tpu_custom_call.1} parent=27 // loop_pre_header
          _
        $region30: #{tpu_custom_call.1} parent=27 // loop_header
          %s188 = sphi 0, %s192
          %p189 = scmp.ge.s32.totalorder %s188, 16
        $region31: #{tpu_custom_call.1} parent=27 // loop_header_branch
          %191 = sbr.rel (%p189) target = $region35
        $region32: #{tpu_custom_call.1} parent=27 // loop_body
          %s193 = smul.u32 %s188, 64
          %s194 = scalar_lea.vmem %s175, %s193
          %v195 = vld [vmem:[%s194] sm:$0xff]
          %v196 = vld [vmem:[%s194 + $0x8] sm:$0xff]
          %v197 = vld [vmem:[%s194 + $0x10] sm:$0xff]
          %v198 = vld [vmem:[%s194 + $0x18] sm:$0xff]
          %v199 = vld [vmem:[%s194 + $0x20] sm:$0xff]
          %v200 = vld [vmem:[%s194 + $0x28] sm:$0xff]
          %v201 = vld [vmem:[%s194 + $0x30] sm:$0xff]
          %v202 = vld [vmem:[%s194 + $0x38] sm:$0xff]
          %v203 = vld [vmem:[%s194 + $0x40] sm:$0xff]
          %v204 = vld [vmem:[%s194 + $0x48] sm:$0xff]
          %v205 = vld [vmem:[%s194 + $0x50] sm:$0xff]
          %v206 = vld [vmem:[%s194 + $0x58] sm:$0xff]
          %v207 = vld [vmem:[%s194 + $0x60] sm:$0xff]
          %v208 = vld [vmem:[%s194 + $0x68] sm:$0xff]
          %v209 = vld [vmem:[%s194 + $0x70] sm:$0xff]
          %v210 = vld [vmem:[%s194 + $0x78] sm:$0xff]
          %v211 = vld [vmem:[%s194 + $0x80] sm:$0xff]
          %v212 = vld [vmem:[%s194 + $0x88] sm:$0xff]
          %v213 = vld [vmem:[%s194 + $0x90] sm:$0xff]
          %v214 = vld [vmem:[%s194 + $0x98] sm:$0xff]
          %v215 = vld [vmem:[%s194 + $0xa0] sm:$0xff]
          %v216 = vld [vmem:[%s194 + $0xa8] sm:$0xff]
          %v217 = vld [vmem:[%s194 + $0xb0] sm:$0xff]
          %v218 = vld [vmem:[%s194 + $0xb8] sm:$0xff]
          %v219 = vld [vmem:[%s194 + $0xc0] sm:$0xff]
          %v220 = vld [vmem:[%s194 + $0xc8] sm:$0xff]
          %v221 = vld [vmem:[%s194 + $0xd0] sm:$0xff]
          %v222 = vld [vmem:[%s194 + $0xd8] sm:$0xff]
          %v223 = vld [vmem:[%s194 + $0xe0] sm:$0xff]
          %v224 = vld [vmem:[%s194 + $0xe8] sm:$0xff]
          %v225 = vld [vmem:[%s194 + $0xf0] sm:$0xff]
          %v226 = vld [vmem:[%s194 + $0xf8] sm:$0xff]
          %259 = vrot.lane.b32.xlu0 %v195, 127
          %v260 = vpop.permute.xlu0 %259
          %261 = vrot.lane.b32.xlu0 %v196, 127
          %v262 = vpop.permute.xlu0 %261
          %263 = vrot.lane.b32.xlu0 %v197, 127
          %v264 = vpop.permute.xlu0 %263
          %265 = vrot.lane.b32.xlu0 %v198, 127
          %v266 = vpop.permute.xlu0 %265
          %267 = vrot.lane.b32.xlu0 %v199, 127
          %v268 = vpop.permute.xlu0 %267
          %269 = vrot.lane.b32.xlu0 %v200, 127
          %v270 = vpop.permute.xlu0 %269
          %271 = vrot.lane.b32.xlu0 %v201, 127
          %v272 = vpop.permute.xlu0 %271
          %273 = vrot.lane.b32.xlu0 %v202, 127
          %v274 = vpop.permute.xlu0 %273
          %275 = vrot.lane.b32.xlu0 %v203, 127
          %v276 = vpop.permute.xlu0 %275
          %277 = vrot.lane.b32.xlu0 %v204, 127
          %v278 = vpop.permute.xlu0 %277
          %279 = vrot.lane.b32.xlu0 %v205, 127
          %v280 = vpop.permute.xlu0 %279
          %281 = vrot.lane.b32.xlu0 %v206, 127
          %v282 = vpop.permute.xlu0 %281
          %283 = vrot.lane.b32.xlu0 %v207, 127
          %v284 = vpop.permute.xlu0 %283
          %285 = vrot.lane.b32.xlu0 %v208, 127
          %v286 = vpop.permute.xlu0 %285
          %287 = vrot.lane.b32.xlu0 %v209, 127
          %v288 = vpop.permute.xlu0 %287
          %289 = vrot.lane.b32.xlu0 %v210, 127
          %v290 = vpop.permute.xlu0 %289
          %291 = vrot.lane.b32.xlu0 %v211, 127
          %v292 = vpop.permute.xlu0 %291
          %293 = vrot.lane.b32.xlu0 %v212, 127
          %v294 = vpop.permute.xlu0 %293
          %295 = vrot.lane.b32.xlu0 %v213, 127
          %v296 = vpop.permute.xlu0 %295
          %297 = vrot.lane.b32.xlu0 %v214, 127
          %v298 = vpop.permute.xlu0 %297
          %299 = vrot.lane.b32.xlu0 %v215, 127
          %v300 = vpop.permute.xlu0 %299
          %301 = vrot.lane.b32.xlu0 %v216, 127
          %v302 = vpop.permute.xlu0 %301
          %303 = vrot.lane.b32.xlu0 %v217, 127
          %v304 = vpop.permute.xlu0 %303
          %305 = vrot.lane.b32.xlu0 %v218, 127
          %v306 = vpop.permute.xlu0 %305
          %307 = vrot.lane.b32.xlu0 %v219, 127
          %v308 = vpop.permute.xlu0 %307
          %309 = vrot.lane.b32.xlu0 %v220, 127
          %v310 = vpop.permute.xlu0 %309
          %311 = vrot.lane.b32.xlu0 %v221, 127
          %v312 = vpop.permute.xlu0 %311
          %313 = vrot.lane.b32.xlu0 %v222, 127
          %v314 = vpop.permute.xlu0 %313
          %315 = vrot.lane.b32.xlu0 %v223, 127
          %v316 = vpop.permute.xlu0 %315
          %317 = vrot.lane.b32.xlu0 %v224, 127
          %v318 = vpop.permute.xlu0 %317
          %319 = vrot.lane.b32.xlu0 %v225, 127
          %v320 = vpop.permute.xlu0 %319
          %321 = vrot.lane.b32.xlu0 %v226, 127
          %v322 = vpop.permute.xlu0 %321
          %355 = vmatpush.msra.mxu0 %v290
          %356 = vmatpush.msra.mxu0 %v288
          %357 = vmatpush.msra.mxu0 %v286
          %358 = vmatpush.msra.mxu0 %v284
          %359 = vmatpush.msra.mxu0 %v282
          %360 = vmatpush.msra.mxu0 %v280
          %361 = vmatpush.msra.mxu0 %v278
          %362 = vmatpush.msra.mxu0 %v276
          %363 = vmatpush.msra.mxu0 %v274
          %364 = vmatpush.msra.mxu0 %v272
          %365 = vmatpush.msra.mxu0 %v270
          %366 = vmatpush.msra.mxu0 %v268
          %367 = vmatpush.msra.mxu0 %v266
          %368 = vmatpush.msra.mxu0 %v264
          %369 = vmatpush.msra.mxu0 %v262
          %370 = vmatpush.msra.mxu0 %v260
          %371 = vmatmul.f32.gmra.mxu0 %v179
          %v372 = vpop.f32.mrf.mxu0
          %v373 = vadd.f32 0.0, %v372
          %374 = vdwg.mxu0
          %375 = vmatpush.msra.mxu0 %v322
          %376 = vmatpush.msra.mxu0 %v320
          %377 = vmatpush.msra.mxu0 %v318
          %378 = vmatpush.msra.mxu0 %v316
          %379 = vmatpush.msra.mxu0 %v314
          %380 = vmatpush.msra.mxu0 %v312
          %381 = vmatpush.msra.mxu0 %v310
          %382 = vmatpush.msra.mxu0 %v308
          %383 = vmatpush.msra.mxu0 %v306
          %384 = vmatpush.msra.mxu0 %v304
          %385 = vmatpush.msra.mxu0 %v302
          %386 = vmatpush.msra.mxu0 %v300
          %387 = vmatpush.msra.mxu0 %v298
          %388 = vmatpush.msra.mxu0 %v296
          %389 = vmatpush.msra.mxu0 %v294
          %390 = vmatpush.msra.mxu0 %v292
          %391 = vmatmul.f32.gmra.mxu0 %v180
          %v392 = vpop.f32.mrf.mxu0
          %v393 = vadd.f32 %v373, %v392
          %394 = vdwg.mxu0
          %395 = vmatpush.msra.mxu0 %v210
          %396 = vmatpush.msra.mxu0 %v209
          %397 = vmatpush.msra.mxu0 %v208
          %398 = vmatpush.msra.mxu0 %v207
          %399 = vmatpush.msra.mxu0 %v206
          %400 = vmatpush.msra.mxu0 %v205
          %401 = vmatpush.msra.mxu0 %v204
          %402 = vmatpush.msra.mxu0 %v203
          %403 = vmatpush.msra.mxu0 %v202
          %404 = vmatpush.msra.mxu0 %v201
          %405 = vmatpush.msra.mxu0 %v200
          %406 = vmatpush.msra.mxu0 %v199
          %407 = vmatpush.msra.mxu0 %v198
          %408 = vmatpush.msra.mxu0 %v197
          %409 = vmatpush.msra.mxu0 %v196
          %410 = vmatpush.msra.mxu0 %v195
          %411 = vmatmul.f32.gmra.mxu0 %v176
          %v412 = vpop.f32.mrf.mxu0
          %v413 = vadd.f32 %v393, %v412
          %414 = vdwg.mxu0
          %415 = vmatpush.msra.mxu0 %v226
          %416 = vmatpush.msra.mxu0 %v225
          %417 = vmatpush.msra.mxu0 %v224
          %418 = vmatpush.msra.mxu0 %v223
          %419 = vmatpush.msra.mxu0 %v222
          %420 = vmatpush.msra.mxu0 %v221
          %421 = vmatpush.msra.mxu0 %v220
          %422 = vmatpush.msra.mxu0 %v219
          %423 = vmatpush.msra.mxu0 %v218
          %424 = vmatpush.msra.mxu0 %v217
          %425 = vmatpush.msra.mxu0 %v216
          %426 = vmatpush.msra.mxu0 %v215
          %427 = vmatpush.msra.mxu0 %v214
          %428 = vmatpush.msra.mxu0 %v213
          %429 = vmatpush.msra.mxu0 %v212
          %430 = vmatpush.msra.mxu0 %v211
          %431 = vmatmul.f32.gmra.mxu0 %v177
          %v432 = vpop.f32.mrf.mxu0
          %v433 = vadd.f32 %v413, %v432
          %434 = vdwg.mxu0
          %435 = vrot.lane.b32.xlu0 %v195, 126
          %v436 = vpop.permute.xlu0 %435
          %437 = vrot.lane.b32.xlu0 %v196, 126
          %v438 = vpop.permute.xlu0 %437
          %439 = vrot.lane.b32.xlu0 %v197, 126
          %v440 = vpop.permute.xlu0 %439
          %441 = vrot.lane.b32.xlu0 %v198, 126
          %v442 = vpop.permute.xlu0 %441
          %443 = vrot.lane.b32.xlu0 %v199, 126
          %v444 = vpop.permute.xlu0 %443
          %445 = vrot.lane.b32.xlu0 %v200, 126
          %v446 = vpop.permute.xlu0 %445
          %447 = vrot.lane.b32.xlu0 %v201, 126
          %v448 = vpop.permute.xlu0 %447
          %449 = vrot.lane.b32.xlu0 %v202, 126
          %v450 = vpop.permute.xlu0 %449
          %451 = vrot.lane.b32.xlu0 %v203, 126
          %v452 = vpop.permute.xlu0 %451
          %453 = vrot.lane.b32.xlu0 %v204, 126
          %v454 = vpop.permute.xlu0 %453
          %455 = vrot.lane.b32.xlu0 %v205, 126
          %v456 = vpop.permute.xlu0 %455
          %457 = vrot.lane.b32.xlu0 %v206, 126
          %v458 = vpop.permute.xlu0 %457
          %459 = vrot.lane.b32.xlu0 %v207, 126
          %v460 = vpop.permute.xlu0 %459
          %461 = vrot.lane.b32.xlu0 %v208, 126
          %v462 = vpop.permute.xlu0 %461
          %463 = vrot.lane.b32.xlu0 %v209, 126
          %v464 = vpop.permute.xlu0 %463
          %465 = vrot.lane.b32.xlu0 %v210, 126
          %v466 = vpop.permute.xlu0 %465
          %467 = vrot.lane.b32.xlu0 %v211, 126
          %v468 = vpop.permute.xlu0 %467
          %469 = vrot.lane.b32.xlu0 %v212, 126
          %v470 = vpop.permute.xlu0 %469
          %471 = vrot.lane.b32.xlu0 %v213, 126
          %v472 = vpop.permute.xlu0 %471
          %473 = vrot.lane.b32.xlu0 %v214, 126
          %v474 = vpop.permute.xlu0 %473
          %475 = vrot.lane.b32.xlu0 %v215, 126
          %v476 = vpop.permute.xlu0 %475
          %477 = vrot.lane.b32.xlu0 %v216, 126
          %v478 = vpop.permute.xlu0 %477
          %479 = vrot.lane.b32.xlu0 %v217, 126
          %v480 = vpop.permute.xlu0 %479
          %481 = vrot.lane.b32.xlu0 %v218, 126
          %v482 = vpop.permute.xlu0 %481
          %483 = vrot.lane.b32.xlu0 %v219, 126
          %v484 = vpop.permute.xlu0 %483
          %485 = vrot.lane.b32.xlu0 %v220, 126
          %v486 = vpop.permute.xlu0 %485
          %487 = vrot.lane.b32.xlu0 %v221, 126
          %v488 = vpop.permute.xlu0 %487
          %489 = vrot.lane.b32.xlu0 %v222, 126
          %v490 = vpop.permute.xlu0 %489
          %491 = vrot.lane.b32.xlu0 %v223, 126
          %v492 = vpop.permute.xlu0 %491
          %493 = vrot.lane.b32.xlu0 %v224, 126
          %v494 = vpop.permute.xlu0 %493
          %495 = vrot.lane.b32.xlu0 %v225, 126
          %v496 = vpop.permute.xlu0 %495
          %497 = vrot.lane.b32.xlu0 %v226, 126
          %v498 = vpop.permute.xlu0 %497
          %531 = vmatpush.msra.mxu0 %v466
          %532 = vmatpush.msra.mxu0 %v464
          %533 = vmatpush.msra.mxu0 %v462
          %534 = vmatpush.msra.mxu0 %v460
          %535 = vmatpush.msra.mxu0 %v458
          %536 = vmatpush.msra.mxu0 %v456
          %537 = vmatpush.msra.mxu0 %v454
          %538 = vmatpush.msra.mxu0 %v452
          %539 = vmatpush.msra.mxu0 %v450
          %540 = vmatpush.msra.mxu0 %v448
          %541 = vmatpush.msra.mxu0 %v446
          %542 = vmatpush.msra.mxu0 %v444
          %543 = vmatpush.msra.mxu0 %v442
          %544 = vmatpush.msra.mxu0 %v440
          %545 = vmatpush.msra.mxu0 %v438
          %546 = vmatpush.msra.mxu0 %v436
          %547 = vmatmul.f32.gmra.mxu0 %v182
          %v548 = vpop.f32.mrf.mxu0
          %v549 = vadd.f32 0.0, %v548
          %550 = vdwg.mxu0
          %551 = vmatpush.msra.mxu0 %v498
          %552 = vmatpush.msra.mxu0 %v496
          %553 = vmatpush.msra.mxu0 %v494
          %554 = vmatpush.msra.mxu0 %v492
          %555 = vmatpush.msra.mxu0 %v490
          %556 = vmatpush.msra.mxu0 %v488
          %557 = vmatpush.msra.mxu0 %v486
          %558 = vmatpush.msra.mxu0 %v484
          %559 = vmatpush.msra.mxu0 %v482
          %560 = vmatpush.msra.mxu0 %v480
          %561 = vmatpush.msra.mxu0 %v478
          %562 = vmatpush.msra.mxu0 %v476
          %563 = vmatpush.msra.mxu0 %v474
          %564 = vmatpush.msra.mxu0 %v472
          %565 = vmatpush.msra.mxu0 %v470
          %566 = vmatpush.msra.mxu0 %v468
          %567 = vmatmul.f32.gmra.mxu0 %v183
          %v568 = vpop.f32.mrf.mxu0
          %v569 = vadd.f32 %v549, %v568
          %570 = vdwg.mxu0
          %v571 = vadd.f32 %v433, %v569
          %572 = vrot.lane.b32.xlu0 %v195, 125
          %v573 = vpop.permute.xlu0 %572
          %574 = vrot.lane.b32.xlu0 %v196, 125
          %v575 = vpop.permute.xlu0 %574
          %576 = vrot.lane.b32.xlu0 %v197, 125
          %v577 = vpop.permute.xlu0 %576
          %578 = vrot.lane.b32.xlu0 %v198, 125
          %v579 = vpop.permute.xlu0 %578
          %580 = vrot.lane.b32.xlu0 %v199, 125
          %v581 = vpop.permute.xlu0 %580
          %582 = vrot.lane.b32.xlu0 %v200, 125
          %v583 = vpop.permute.xlu0 %582
          %584 = vrot.lane.b32.xlu0 %v201, 125
          %v585 = vpop.permute.xlu0 %584
          %586 = vrot.lane.b32.xlu0 %v202, 125
          %v587 = vpop.permute.xlu0 %586
          %588 = vrot.lane.b32.xlu0 %v203, 125
          %v589 = vpop.permute.xlu0 %588
          %590 = vrot.lane.b32.xlu0 %v204, 125
          %v591 = vpop.permute.xlu0 %590
          %592 = vrot.lane.b32.xlu0 %v205, 125
          %v593 = vpop.permute.xlu0 %592
          %594 = vrot.lane.b32.xlu0 %v206, 125
          %v595 = vpop.permute.xlu0 %594
          %596 = vrot.lane.b32.xlu0 %v207, 125
          %v597 = vpop.permute.xlu0 %596
          %598 = vrot.lane.b32.xlu0 %v208, 125
          %v599 = vpop.permute.xlu0 %598
          %600 = vrot.lane.b32.xlu0 %v209, 125
          %v601 = vpop.permute.xlu0 %600
          %602 = vrot.lane.b32.xlu0 %v210, 125
          %v603 = vpop.permute.xlu0 %602
          %604 = vrot.lane.b32.xlu0 %v211, 125
          %v605 = vpop.permute.xlu0 %604
          %606 = vrot.lane.b32.xlu0 %v212, 125
          %v607 = vpop.permute.xlu0 %606
          %608 = vrot.lane.b32.xlu0 %v213, 125
          %v609 = vpop.permute.xlu0 %608
          %610 = vrot.lane.b32.xlu0 %v214, 125
          %v611 = vpop.permute.xlu0 %610
          %612 = vrot.lane.b32.xlu0 %v215, 125
          %v613 = vpop.permute.xlu0 %612
          %614 = vrot.lane.b32.xlu0 %v216, 125
          %v615 = vpop.permute.xlu0 %614
          %616 = vrot.lane.b32.xlu0 %v217, 125
          %v617 = vpop.permute.xlu0 %616
          %618 = vrot.lane.b32.xlu0 %v218, 125
          %v619 = vpop.permute.xlu0 %618
          %620 = vrot.lane.b32.xlu0 %v219, 125
          %v621 = vpop.permute.xlu0 %620
          %622 = vrot.lane.b32.xlu0 %v220, 125
          %v623 = vpop.permute.xlu0 %622
          %624 = vrot.lane.b32.xlu0 %v221, 125
          %v625 = vpop.permute.xlu0 %624
          %626 = vrot.lane.b32.xlu0 %v222, 125
          %v627 = vpop.permute.xlu0 %626
          %628 = vrot.lane.b32.xlu0 %v223, 125
          %v629 = vpop.permute.xlu0 %628
          %630 = vrot.lane.b32.xlu0 %v224, 125
          %v631 = vpop.permute.xlu0 %630
          %632 = vrot.lane.b32.xlu0 %v225, 125
          %v633 = vpop.permute.xlu0 %632
          %634 = vrot.lane.b32.xlu0 %v226, 125
          %v635 = vpop.permute.xlu0 %634
          %668 = vmatpush.msra.mxu0 %v603
          %669 = vmatpush.msra.mxu0 %v601
          %670 = vmatpush.msra.mxu0 %v599
          %671 = vmatpush.msra.mxu0 %v597
          %672 = vmatpush.msra.mxu0 %v595
          %673 = vmatpush.msra.mxu0 %v593
          %674 = vmatpush.msra.mxu0 %v591
          %675 = vmatpush.msra.mxu0 %v589
          %676 = vmatpush.msra.mxu0 %v587
          %677 = vmatpush.msra.mxu0 %v585
          %678 = vmatpush.msra.mxu0 %v583
          %679 = vmatpush.msra.mxu0 %v581
          %680 = vmatpush.msra.mxu0 %v579
          %681 = vmatpush.msra.mxu0 %v577
          %682 = vmatpush.msra.mxu0 %v575
          %683 = vmatpush.msra.mxu0 %v573
          %684 = vmatmul.f32.gmra.mxu0 %v185
          %v685 = vpop.f32.mrf.mxu0
          %v686 = vadd.f32 0.0, %v685
          %687 = vdwg.mxu0
          %688 = vmatpush.msra.mxu0 %v635
          %689 = vmatpush.msra.mxu0 %v633
          %690 = vmatpush.msra.mxu0 %v631
          %691 = vmatpush.msra.mxu0 %v629
          %692 = vmatpush.msra.mxu0 %v627
          %693 = vmatpush.msra.mxu0 %v625
          %694 = vmatpush.msra.mxu0 %v623
          %695 = vmatpush.msra.mxu0 %v621
          %696 = vmatpush.msra.mxu0 %v619
          %697 = vmatpush.msra.mxu0 %v617
          %698 = vmatpush.msra.mxu0 %v615
          %699 = vmatpush.msra.mxu0 %v613
          %700 = vmatpush.msra.mxu0 %v611
          %701 = vmatpush.msra.mxu0 %v609
          %702 = vmatpush.msra.mxu0 %v607
          %703 = vmatpush.msra.mxu0 %v605
          %704 = vmatmul.f32.gmra.mxu0 %v186
          %v705 = vpop.f32.mrf.mxu0
          %v706 = vadd.f32 %v686, %v705
          %707 = vdwg.mxu0
          %v708 = vadd.f32 %v571, %v706
          %s709 = smul.u32 %s188, 8
          %s710 = scalar_lea.vmem %s165, %s709 [#allocation2]
          %vm711 = vcmask 130048
          %712 = vst.msk [vmem:[%s710] sm:$0xff] %vm711, %v708
        $region33: #{tpu_custom_call.1} parent=27 // loop_footer
          %s192 = sadd.s32 1, %s188
        $region34: #{tpu_custom_call.1} parent=27 // loop_footer_branch
          %187 = sbr.rel target = $region30
        $region35: #{tpu_custom_call.1} parent=27 // loop_exit
          _
        %s713 = sand.u32 %s90, 1
        %s714 = scalar_lea.sflag [#allocation3], %s713
        %s715 = sand.u32 %s90, 1
        %s716 = smul.addr %s715, 128
        %s717 = scalar_lea.vmem [#allocation2], %s716
        // Predicated region
        $region36: #{tpu_custom_call.1} parent=27 // pred_check
          %p718 = pneg %p100
        $region37: #{tpu_custom_call.1} parent=27 // pred_check_branch
          %720 = sbr.rel (%p718) target = $region39
        $region38: #{tpu_custom_call.1} parent=27 // pred_region
          %722 = vsyncadd %s714, 0
          %s723 = smul.addr %s21, 16
          %s724 = smul.addr %s20, 64
          %s725 = sadd.s32 %s723, %s724
          %s726 = smul.addr %s725, 8
          %s727 = scalar_lea.hbm %s2, %s726
          %s728 = sshll.u32 %s717, 4
          %s729 = int_to_ptr.vmem [resolvable:$true] %s728
          %s730 = sshll.u32 %s727, 4
          %s731 = int_to_ptr.hbm [resolvable:$true] %s730
          %736 = dma.vmem_to_hbm [thread:$0]  %s729, 2048, %s731, %s714, 128, 128, 8
        $region39: #{tpu_custom_call.1} parent=27 // pred_fallthru
          _
      $region28: #{tpu_custom_call.1} parent=5 // pred_fallthru
        _
      %p737 = scmp.le.s32.totalorder 2, %s11
      // Predicated region
      $region40: #{tpu_custom_call.1} parent=5 // pred_check
        %p738 = pneg %p737
      $region41: #{tpu_custom_call.1} parent=5 // pred_check_branch
        %740 = sbr.rel (%p738) target = $region43
      $region42: #{tpu_custom_call.1} parent=5 // pred_region
        %s741 = ssub.s32 %s11, 2
        // Predicated region
        $region44: #{tpu_custom_call.1} parent=42 // pred_check
          %p742 = pneg %p106
        $region45: #{tpu_custom_call.1} parent=42 // pred_check_branch
          %744 = sbr.rel (%p742) target = $region47
        $region46: #{tpu_custom_call.1} parent=42 // pred_region
          %s745 = sand.u32 %s91, 1
          %s746 = scalar_lea.sflag [#allocation3], %s745
          %s747 = sand.u32 %s91, 1
          %s748 = smul.addr %s747, 128
          %s749 = scalar_lea.vmem [#allocation2], %s748
          %751 = dma.done %s746, 2048
        $region47: #{tpu_custom_call.1} parent=42 // pred_fallthru
          _
      $region43: #{tpu_custom_call.1} parent=5 // pred_fallthru
        _
    $region6: #{tpu_custom_call.1} parent=1 // loop_footer
      %s15 = sadd.s32 1, %s11
    $region7: #{tpu_custom_call.1} parent=1 // loop_footer_branch
      %10 = sbr.rel target = $region3
    $region8: #{tpu_custom_call.1} parent=1 // loop_exit
      _
    %752 = vsyncpa [#allocation3], 1
    %s753 = scalar_lea.sflag [#allocation3], 1
    %754 = vsyncpa %s753, 1

</llo_original>
